<compile_context>
chip_gen: v5e
topology: v5e:2x2
jax: 0.10.0
libtpu: 0.0.40
codegen_flags: <defaults>
</compile_context>

<pallas_src>
import functools

import jax
import jax.numpy as jnp
import numpy as np
from jax.experimental import pallas as pl
from jax.experimental.pallas import tpu as pltpu


# --------------------------------------------------------------------------
# Kernel 1: fused conv3x3(pad=1) + ReLU + maxpool(2,2).
# Grid = (batch, h_strip); each step produces ALL Cout pooled channels for
# one strip of rows, packed lane-dense as (strip_rows/2, Cout*Wo).
# --------------------------------------------------------------------------
def _conv_relu_pool_kernel(x_ref, w_ref, b_ref, pce_ref, o_ref, nb_ref,
                           *, cin, cout, W, rs):
    # x_ref : (1, cin, H+2, W+2)  padded planes, VMEM (strip-invariant)
    # w_ref : (cout*cin*9,)       flattened conv weights, SMEM scalars
    # b_ref : (cout,)             conv bias, SMEM scalars
    # pce   : (W-1, Wo)           even-column 0/1 selector, VMEM
    # o_ref : (1, rs//2, cout*Wo) pooled, channel-packed output strip
    # nb_ref: (rs-1, cout*Wo)     VMEM scratch for the row-neighbor max
    s = pl.program_id(1)
    row0 = pl.multiple_of(s * rs, 8)          # strip start row in padded plane
    Wo = W // 2

    # ---- conv: shifted input tiles built once, reused across all oc ----
    accs = [jnp.zeros((rs, W), jnp.float32) for _ in range(cout)]
    for ic in range(cin):
        for kh in range(3):
            for kw in range(3):
                xs = x_ref[0, ic, pl.ds(row0 + kh, rs), pl.ds(kw, W)]
                base = ic * 9 + kh * 3 + kw
                for oc in range(cout):
                    accs[oc] = accs[oc] + w_ref[oc * cin * 9 + base] * xs

    # ---- bias + ReLU + column half of the 2x2 pool, channel-packed ----
    pce = pce_ref[...]
    cols = []
    for oc in range(cout):
        a = jnp.maximum(accs[oc] + b_ref[oc], 0.0)            # (rs, W)
        cm = jnp.maximum(a[:, :W - 1], a[:, 1:])              # (rs, W-1)
        cols.append(jnp.dot(cm, pce,
                            preferred_element_type=jnp.float32))   # (rs, Wo)
    slab = jnp.concatenate(cols, axis=-1)                     # (rs, cout*Wo)

    # ---- row half: neighbor max, stage in VMEM, stride-2 even-row read ----
    nb_ref[...] = jnp.maximum(slab[:rs - 1, :], slab[1:, :])  # (rs-1, cout*Wo)
    o_ref[0] = nb_ref[pl.ds(0, rs // 2, stride=2), :]         # rows 0,2,4,...


def _pick_strip_rows(H, cap=16):
    # Strip row count must divide H and give sublane-aligned pooled strips
    # (rs % 16 == 0), unless the strip is the whole height.  cap=16 so the
    # small demo exercises the multi-strip path; use 32-64 at 960x540.
    for rs in range(min(cap, H), 15, -1):
        if H % rs == 0 and rs % 16 == 0:
            return rs
    return H


def conv_relu_pool(x, w, b, *, rows_per_strip=None):
    """x: (B, Cin, H, W) f32; w: (Cout, Cin, 3, 3); b: (Cout,).
    Returns (B, Cout, H//2, W//2) f32 (NCHW, like PyTorch)."""
    B, Cin, H, W = x.shape
    Cout = w.shape[0]
    Ho, Wo = H // 2, W // 2

    rs = rows_per_strip if rows_per_strip is not None else _pick_strip_rows(H)
    assert H % rs == 0 and rs % 2 == 0 and (rs == H or rs % 16 == 0)
    n_strips = H // rs

    xp = jnp.pad(x, ((0, 0), (0, 0), (1, 1), (1, 1))).astype(jnp.float32)
    w_flat = w.reshape(-1).astype(jnp.float32)
    b = b.astype(jnp.float32)

    # 0/1 selector picking even columns of the column-neighbor-max plane.
    pce = (jnp.arange(W - 1)[:, None] ==
           2 * jnp.arange(Wo)[None, :]).astype(jnp.float32)          # (W-1, Wo)

    kernel = functools.partial(_conv_relu_pool_kernel,
                               cin=Cin, cout=Cout, W=W, rs=rs)

    y = pl.pallas_call(
        kernel,
        out_shape=jax.ShapeDtypeStruct((B, Ho, Cout * Wo), jnp.float32),
        grid=(B, n_strips),
        in_specs=[
            # padded planes: invariant across strips -> stay VMEM-resident
            pl.BlockSpec((1, Cin, H + 2, W + 2), lambda bb, s: (bb, 0, 0, 0)),
            pl.BlockSpec(memory_space=pltpu.MemorySpace.SMEM),   # conv weights
            pl.BlockSpec(memory_space=pltpu.MemorySpace.SMEM),   # conv bias
            pl.BlockSpec((W - 1, Wo), lambda bb, s: (0, 0)),     # col selector
        ],
        out_specs=pl.BlockSpec((1, rs // 2, Cout * Wo),
                               lambda bb, s: (bb, s, 0)),
        scratch_shapes=[pltpu.VMEM((rs - 1, Cout * Wo), jnp.float32)],
        compiler_params=pltpu.CompilerParams(
            dimension_semantics=("parallel", "parallel")),
    )(xp, w_flat, b, pce)

    # channel-packed lane-dense slab -> NCHW (layout plumbing in the wrapper)
    return y.reshape(B, Ho, Cout, Wo).transpose(0, 2, 1, 3)


# --------------------------------------------------------------------------
# Kernel 2: fc1 as a split-K bf16 matmul with an f32 VMEM accumulator.
# Grid = (n_split, nk): the leading "parallel" axis streams disjoint halves
# of fc1_w (both TCs on v7x); the trailing "arbitrary" axis is the K
# reduction.  Bias + ReLU + the tiny fc2 (128x2) run in plain XLA afterwards.
# --------------------------------------------------------------------------
def _fc1_partial_kernel(x_ref, w1_ref, o_ref, acc_ref):
    k = pl.program_id(1)

    @pl.when(k == 0)
    def _():
        acc_ref[...] = jnp.zeros_like(acc_ref)

    acc_ref[...] += jnp.dot(x_ref[...], w1_ref[...],
                            preferred_element_type=jnp.float32)

    @pl.when(k == pl.num_programs(1) - 1)
    def _():
        o_ref[0] = acc_ref[...]


def mlp_head(x, w1, b1, w2, b2, *, tk=4096, n_split=2):
    """x: (B, F); w1: (F, H1); w2: (H1, H2) -> (B, H2).
    At the real F = 16*240*135 use tk in the thousands (e.g. 6400)."""
    B, F = x.shape
    H1 = w1.shape[1]

    # bf16 weight/activation streaming (fc1 is HBM-bandwidth bound); f32 acc.
    x16 = x.astype(jnp.bfloat16)
    w116 = w1.astype(jnp.bfloat16)

    tk = int(min(tk, F))
    tk = max(128, (tk // 128) * 128)                 # lane-aligned K tile
    nk_total = -(-F // tk)                           # ceil(F / tk)
    nk_total = -(-nk_total // n_split) * n_split     # equal work per split
    Fp = nk_total * tk
    if Fp != F:                                      # zero-pad K (no tk=F fallback)
        x16 = jnp.pad(x16, ((0, 0), (0, Fp - F)))
        w116 = jnp.pad(w116, ((0, Fp - F), (0, 0)))
    nk = nk_total // n_split

    partial = pl.pallas_call(
        _fc1_partial_kernel,
        out_shape=jax.ShapeDtypeStruct((n_split, B, H1), jnp.float32),
        grid=(n_split, nk),
        in_specs=[
            pl.BlockSpec((B, tk), lambda i, k: (0, i * nk + k)),   # activations
            pl.BlockSpec((tk, H1), lambda i, k: (i * nk + k, 0)),  # fc1 K-tile
        ],
        out_specs=pl.BlockSpec((1, B, H1), lambda i, k: (i, 0, 0)),
        scratch_shapes=[pltpu.VMEM((B, H1), jnp.float32)],
        compiler_params=pltpu.CompilerParams(
            dimension_semantics=("parallel", "arbitrary")),
    )(x16, w116)

    h = jnp.maximum(partial.sum(axis=0) + b1[None, :], 0.0)   # fc1 bias + ReLU
    return h @ w2 + b2[None, :]                               # fc2 (tiny, XLA)


# --------------------------------------------------------------------------
# Full DinoCNN forward (glue in plain JAX; hot paths in Pallas).
# --------------------------------------------------------------------------
def dino_cnn_forward(params, x, *, mlp_tk=4096, mlp_split=2):
    x = conv_relu_pool(x, params["conv1_w"], params["conv1_b"])   # (B,4,H/2,W/2)
    x = conv_relu_pool(x, params["conv2_w"], params["conv2_b"])   # (B,16,H/4,W/4)
    B = x.shape[0]
    x = x.reshape(B, -1)                       # == torch .view(-1, C*H*W)
    return mlp_head(x, params["fc1_w"], params["fc1_b"],
                    params["fc2_w"], params["fc2_b"],
                    tk=mlp_tk, n_split=mlp_split)


# --------------------------------------------------------------------------
# Pure-JAX reference (sanity check of the kernel semantics).
# --------------------------------------------------------------------------
def dino_cnn_reference(params, x):
    def conv(x, w, b):
        y = jax.lax.conv_general_dilated(
            x, w, window_strides=(1, 1), padding="SAME",
            dimension_numbers=("NCHW", "OIHW", "NCHW"))
        return y + b[None, :, None, None]

    def pool(x):
        B, C, H, W = x.shape
        return x.reshape(B, C, H // 2, 2, W // 2, 2).max(axis=(3, 5))

    x = pool(jnp.maximum(conv(x, params["conv1_w"], params["conv1_b"]), 0.0))
    x = pool(jnp.maximum(conv(x, params["conv2_w"], params["conv2_b"]), 0.0))
    x = x.reshape(x.shape[0], -1)
    x = jnp.maximum(x @ params["fc1_w"] + params["fc1_b"], 0.0)
    return x @ params["fc2_w"] + params["fc2_b"]


def init_params(key, flat_features):
    ks = jax.random.split(key, 8)

    def unif(k, shape, fan_in):
        bound = 1.0 / np.sqrt(fan_in)
        return jax.random.uniform(k, shape, jnp.float32, -bound, bound)

    return {
        "conv1_w": unif(ks[0], (4, 1, 3, 3), 1 * 9),
        "conv1_b": unif(ks[1], (4,), 1 * 9),
        "conv2_w": unif(ks[2], (16, 4, 3, 3), 4 * 9),
        "conv2_b": unif(ks[3], (16,), 4 * 9),
        # stored as (in, out), i.e. transpose of torch's (out, in) Linear weight
        "fc1_w": unif(ks[4], (flat_features, 128), flat_features),
        "fc1_b": unif(ks[5], (128,), flat_features),
        "fc2_w": unif(ks[6], (128, 2), 128),
        "fc2_b": unif(ks[7], (2,), 128),
    }


if __name__ == "__main__":
    B, Cin, H, W = 2, 1, 32, 32                 # small demo shape (NCHW)
    flat_features = 16 * (H // 4) * (W // 4)    # 16*8*8 = 1024 (scaled 16*240*135)

    key = jax.random.PRNGKey(0)
    kx, kp = jax.random.split(key)
    x = jax.random.normal(kx, (B, Cin, H, W), jnp.float32)
    params = init_params(kp, flat_features)

    # mlp_tk=256 -> 4 K-tiles, 2 per split: exercises K-accumulation + split-K.
    out = jax.block_until_ready(dino_cnn_forward(params, x, mlp_tk=256))
    ref = jax.block_until_ready(dino_cnn_reference(params, x))

    assert out.shape == (B, 2), out.shape
    np.testing.assert_allclose(np.asarray(out), np.asarray(ref),
                               rtol=1e-2, atol=1e-2)
    print("KERNEL_OK")
</pallas_src>

<mosaic_0001>
module attributes {stable_mosaic.version = 11 : i64} {
  func.func @_conv_relu_pool_kernel(%arg0: i32, %arg1: i32, %arg2: memref<1x1x34x34xf32, #tpu.memory_space<vmem>>, %arg3: memref<36xf32, #tpu.memory_space<smem>>, %arg4: memref<4xf32, #tpu.memory_space<smem>>, %arg5: memref<31x16xf32, #tpu.memory_space<vmem>>, %arg6: memref<1x8x64xf32, #tpu.memory_space<vmem>>, %arg7: memref<15x64xf32, #tpu.memory_space<vmem>>) attributes {dimension_semantics = [#tpu.dimension_semantics<parallel>, #tpu.dimension_semantics<parallel>], iteration_bounds = array<i64: 2, 2>, scalar_prefetch = 0 : i64, scratch_operands = 1 : i64, tpu.core_type = #tpu.core_type<tc>, window_params = [{transform_indices = @transform_0, window_bounds = array<i64: 1, 1, 34, 34>}, {transform_indices = @transform_1, window_bounds = array<i64: 36>}, {transform_indices = @transform_2, window_bounds = array<i64: 4>}, {pipeline_mode = #tpu.pipeline_mode<synchronous>, transform_indices = @transform_3, window_bounds = array<i64: 31, 16>}, {transform_indices = @transform_4, window_bounds = array<i64: 1, 8, 64>}]} {
    %c16_i32 = arith.constant 16 : i32
    %0 = arith.muli %arg1, %c16_i32 : i32
    %1 = tpu.assume_multiple %0, 8 : i32
    %cst = arith.constant 0.000000e+00 : f32
    %2 = vector.broadcast %cst : f32 to vector<16x32xf32>
    %cst_0 = arith.constant 0.000000e+00 : f32
    %3 = vector.broadcast %cst_0 : f32 to vector<16x32xf32>
    %cst_1 = arith.constant 0.000000e+00 : f32
    %4 = vector.broadcast %cst_1 : f32 to vector<16x32xf32>
    %cst_2 = arith.constant 0.000000e+00 : f32
    %5 = vector.broadcast %cst_2 : f32 to vector<16x32xf32>
    %c0_i32 = arith.constant 0 : i32
    %6 = arith.addi %1, %c0_i32 : i32
    %c0 = arith.constant 0 : index
    %c0_3 = arith.constant 0 : index
    %7 = arith.index_cast %6 : i32 to index
    %c0_4 = arith.constant 0 : index
    %8 = vector.load %arg2[%c0, %c0_3, %7, %c0_4] : memref<1x1x34x34xf32, #tpu.memory_space<vmem>>, vector<1x1x16x32xf32>
    %9 = vector.shape_cast %8 : vector<1x1x16x32xf32> to vector<16x32xf32>
    %c0_5 = arith.constant 0 : index
    %10 = memref.load %arg3[%c0_5] : memref<36xf32, #tpu.memory_space<smem>>
    %11 = vector.broadcast %10 : f32 to vector<16x32xf32>
    %12 = arith.mulf %11, %9 : vector<16x32xf32>
    %13 = arith.addf %2, %12 : vector<16x32xf32>
    %c9 = arith.constant 9 : index
    %14 = memref.load %arg3[%c9] : memref<36xf32, #tpu.memory_space<smem>>
    %15 = vector.broadcast %14 : f32 to vector<16x32xf32>
    %16 = arith.mulf %15, %9 : vector<16x32xf32>
    %17 = arith.addf %3, %16 : vector<16x32xf32>
    %c18 = arith.constant 18 : index
    %18 = memref.load %arg3[%c18] : memref<36xf32, #tpu.memory_space<smem>>
    %19 = vector.broadcast %18 : f32 to vector<16x32xf32>
    %20 = arith.mulf %19, %9 : vector<16x32xf32>
    %21 = arith.addf %4, %20 : vector<16x32xf32>
    %c27 = arith.constant 27 : index
    %22 = memref.load %arg3[%c27] : memref<36xf32, #tpu.memory_space<smem>>
    %23 = vector.broadcast %22 : f32 to vector<16x32xf32>
    %24 = arith.mulf %23, %9 : vector<16x32xf32>
    %25 = arith.addf %5, %24 : vector<16x32xf32>
    %c0_i32_6 = arith.constant 0 : i32
    %26 = arith.addi %1, %c0_i32_6 : i32
    %c0_7 = arith.constant 0 : index
    %c0_8 = arith.constant 0 : index
    %27 = arith.index_cast %26 : i32 to index
    %c1 = arith.constant 1 : index
    %28 = vector.load %arg2[%c0_7, %c0_8, %27, %c1] : memref<1x1x34x34xf32, #tpu.memory_space<vmem>>, vector<1x1x16x32xf32>
    %29 = vector.shape_cast %28 : vector<1x1x16x32xf32> to vector<16x32xf32>
    %c1_9 = arith.constant 1 : index
    %30 = memref.load %arg3[%c1_9] : memref<36xf32, #tpu.memory_space<smem>>
    %31 = vector.broadcast %30 : f32 to vector<16x32xf32>
    %32 = arith.mulf %31, %29 : vector<16x32xf32>
    %33 = arith.addf %13, %32 : vector<16x32xf32>
    %c10 = arith.constant 10 : index
    %34 = memref.load %arg3[%c10] : memref<36xf32, #tpu.memory_space<smem>>
    %35 = vector.broadcast %34 : f32 to vector<16x32xf32>
    %36 = arith.mulf %35, %29 : vector<16x32xf32>
    %37 = arith.addf %17, %36 : vector<16x32xf32>
    %c19 = arith.constant 19 : index
    %38 = memref.load %arg3[%c19] : memref<36xf32, #tpu.memory_space<smem>>
    %39 = vector.broadcast %38 : f32 to vector<16x32xf32>
    %40 = arith.mulf %39, %29 : vector<16x32xf32>
    %41 = arith.addf %21, %40 : vector<16x32xf32>
    %c28 = arith.constant 28 : index
    %42 = memref.load %arg3[%c28] : memref<36xf32, #tpu.memory_space<smem>>
    %43 = vector.broadcast %42 : f32 to vector<16x32xf32>
    %44 = arith.mulf %43, %29 : vector<16x32xf32>
    %45 = arith.addf %25, %44 : vector<16x32xf32>
    %c0_i32_10 = arith.constant 0 : i32
    %46 = arith.addi %1, %c0_i32_10 : i32
    %c0_11 = arith.constant 0 : index
    %c0_12 = arith.constant 0 : index
    %47 = arith.index_cast %46 : i32 to index
    %c2 = arith.constant 2 : index
    %48 = vector.load %arg2[%c0_11, %c0_12, %47, %c2] : memref<1x1x34x34xf32, #tpu.memory_space<vmem>>, vector<1x1x16x32xf32>
    %49 = vector.shape_cast %48 : vector<1x1x16x32xf32> to vector<16x32xf32>
    %c2_13 = arith.constant 2 : index
    %50 = memref.load %arg3[%c2_13] : memref<36xf32, #tpu.memory_space<smem>>
    %51 = vector.broadcast %50 : f32 to vector<16x32xf32>
    %52 = arith.mulf %51, %49 : vector<16x32xf32>
    %53 = arith.addf %33, %52 : vector<16x32xf32>
    %c11 = arith.constant 11 : index
    %54 = memref.load %arg3[%c11] : memref<36xf32, #tpu.memory_space<smem>>
    %55 = vector.broadcast %54 : f32 to vector<16x32xf32>
    %56 = arith.mulf %55, %49 : vector<16x32xf32>
    %57 = arith.addf %37, %56 : vector<16x32xf32>
    %c20 = arith.constant 20 : index
    %58 = memref.load %arg3[%c20] : memref<36xf32, #tpu.memory_space<smem>>
    %59 = vector.broadcast %58 : f32 to vector<16x32xf32>
    %60 = arith.mulf %59, %49 : vector<16x32xf32>
    %61 = arith.addf %41, %60 : vector<16x32xf32>
    %c29 = arith.constant 29 : index
    %62 = memref.load %arg3[%c29] : memref<36xf32, #tpu.memory_space<smem>>
    %63 = vector.broadcast %62 : f32 to vector<16x32xf32>
    %64 = arith.mulf %63, %49 : vector<16x32xf32>
    %65 = arith.addf %45, %64 : vector<16x32xf32>
    %c1_i32 = arith.constant 1 : i32
    %66 = arith.addi %1, %c1_i32 : i32
    %c0_14 = arith.constant 0 : index
    %c0_15 = arith.constant 0 : index
    %67 = arith.index_cast %66 : i32 to index
    %c0_16 = arith.constant 0 : index
    %68 = vector.load %arg2[%c0_14, %c0_15, %67, %c0_16] : memref<1x1x34x34xf32, #tpu.memory_space<vmem>>, vector<1x1x16x32xf32>
    %69 = vector.shape_cast %68 : vector<1x1x16x32xf32> to vector<16x32xf32>
    %c3 = arith.constant 3 : index
    %70 = memref.load %arg3[%c3] : memref<36xf32, #tpu.memory_space<smem>>
    %71 = vector.broadcast %70 : f32 to vector<16x32xf32>
    %72 = arith.mulf %71, %69 : vector<16x32xf32>
    %73 = arith.addf %53, %72 : vector<16x32xf32>
    %c12 = arith.constant 12 : index
    %74 = memref.load %arg3[%c12] : memref<36xf32, #tpu.memory_space<smem>>
    %75 = vector.broadcast %74 : f32 to vector<16x32xf32>
    %76 = arith.mulf %75, %69 : vector<16x32xf32>
    %77 = arith.addf %57, %76 : vector<16x32xf32>
    %c21 = arith.constant 21 : index
    %78 = memref.load %arg3[%c21] : memref<36xf32, #tpu.memory_space<smem>>
    %79 = vector.broadcast %78 : f32 to vector<16x32xf32>
    %80 = arith.mulf %79, %69 : vector<16x32xf32>
    %81 = arith.addf %61, %80 : vector<16x32xf32>
    %c30 = arith.constant 30 : index
    %82 = memref.load %arg3[%c30] : memref<36xf32, #tpu.memory_space<smem>>
    %83 = vector.broadcast %82 : f32 to vector<16x32xf32>
    %84 = arith.mulf %83, %69 : vector<16x32xf32>
    %85 = arith.addf %65, %84 : vector<16x32xf32>
    %c1_i32_17 = arith.constant 1 : i32
    %86 = arith.addi %1, %c1_i32_17 : i32
    %c0_18 = arith.constant 0 : index
    %c0_19 = arith.constant 0 : index
    %87 = arith.index_cast %86 : i32 to index
    %c1_20 = arith.constant 1 : index
    %88 = vector.load %arg2[%c0_18, %c0_19, %87, %c1_20] : memref<1x1x34x34xf32, #tpu.memory_space<vmem>>, vector<1x1x16x32xf32>
    %89 = vector.shape_cast %88 : vector<1x1x16x32xf32> to vector<16x32xf32>
    %c4 = arith.constant 4 : index
    %90 = memref.load %arg3[%c4] : memref<36xf32, #tpu.memory_space<smem>>
    %91 = vector.broadcast %90 : f32 to vector<16x32xf32>
    %92 = arith.mulf %91, %89 : vector<16x32xf32>
    %93 = arith.addf %73, %92 : vector<16x32xf32>
    %c13 = arith.constant 13 : index
    %94 = memref.load %arg3[%c13] : memref<36xf32, #tpu.memory_space<smem>>
    %95 = vector.broadcast %94 : f32 to vector<16x32xf32>
    %96 = arith.mulf %95, %89 : vector<16x32xf32>
    %97 = arith.addf %77, %96 : vector<16x32xf32>
    %c22 = arith.constant 22 : index
    %98 = memref.load %arg3[%c22] : memref<36xf32, #tpu.memory_space<smem>>
    %99 = vector.broadcast %98 : f32 to vector<16x32xf32>
    %100 = arith.mulf %99, %89 : vector<16x32xf32>
    %101 = arith.addf %81, %100 : vector<16x32xf32>
    %c31 = arith.constant 31 : index
    %102 = memref.load %arg3[%c31] : memref<36xf32, #tpu.memory_space<smem>>
    %103 = vector.broadcast %102 : f32 to vector<16x32xf32>
    %104 = arith.mulf %103, %89 : vector<16x32xf32>
    %105 = arith.addf %85, %104 : vector<16x32xf32>
    %c1_i32_21 = arith.constant 1 : i32
    %106 = arith.addi %1, %c1_i32_21 : i32
    %c0_22 = arith.constant 0 : index
    %c0_23 = arith.constant 0 : index
    %107 = arith.index_cast %106 : i32 to index
    %c2_24 = arith.constant 2 : index
    %108 = vector.load %arg2[%c0_22, %c0_23, %107, %c2_24] : memref<1x1x34x34xf32, #tpu.memory_space<vmem>>, vector<1x1x16x32xf32>
    %109 = vector.shape_cast %108 : vector<1x1x16x32xf32> to vector<16x32xf32>
    %c5 = arith.constant 5 : index
    %110 = memref.load %arg3[%c5] : memref<36xf32, #tpu.memory_space<smem>>
    %111 = vector.broadcast %110 : f32 to vector<16x32xf32>
    %112 = arith.mulf %111, %109 : vector<16x32xf32>
    %113 = arith.addf %93, %112 : vector<16x32xf32>
    %c14 = arith.constant 14 : index
    %114 = memref.load %arg3[%c14] : memref<36xf32, #tpu.memory_space<smem>>
    %115 = vector.broadcast %114 : f32 to vector<16x32xf32>
    %116 = arith.mulf %115, %109 : vector<16x32xf32>
    %117 = arith.addf %97, %116 : vector<16x32xf32>
    %c23 = arith.constant 23 : index
    %118 = memref.load %arg3[%c23] : memref<36xf32, #tpu.memory_space<smem>>
    %119 = vector.broadcast %118 : f32 to vector<16x32xf32>
    %120 = arith.mulf %119, %109 : vector<16x32xf32>
    %121 = arith.addf %101, %120 : vector<16x32xf32>
    %c32 = arith.constant 32 : index
    %122 = memref.load %arg3[%c32] : memref<36xf32, #tpu.memory_space<smem>>
    %123 = vector.broadcast %122 : f32 to vector<16x32xf32>
    %124 = arith.mulf %123, %109 : vector<16x32xf32>
    %125 = arith.addf %105, %124 : vector<16x32xf32>
    %c2_i32 = arith.constant 2 : i32
    %126 = arith.addi %1, %c2_i32 : i32
    %c0_25 = arith.constant 0 : index
    %c0_26 = arith.constant 0 : index
    %127 = arith.index_cast %126 : i32 to index
    %c0_27 = arith.constant 0 : index
    %128 = vector.load %arg2[%c0_25, %c0_26, %127, %c0_27] : memref<1x1x34x34xf32, #tpu.memory_space<vmem>>, vector<1x1x16x32xf32>
    %129 = vector.shape_cast %128 : vector<1x1x16x32xf32> to vector<16x32xf32>
    %c6 = arith.constant 6 : index
    %130 = memref.load %arg3[%c6] : memref<36xf32, #tpu.memory_space<smem>>
    %131 = vector.broadcast %130 : f32 to vector<16x32xf32>
    %132 = arith.mulf %131, %129 : vector<16x32xf32>
    %133 = arith.addf %113, %132 : vector<16x32xf32>
    %c15 = arith.constant 15 : index
    %134 = memref.load %arg3[%c15] : memref<36xf32, #tpu.memory_space<smem>>
    %135 = vector.broadcast %134 : f32 to vector<16x32xf32>
    %136 = arith.mulf %135, %129 : vector<16x32xf32>
    %137 = arith.addf %117, %136 : vector<16x32xf32>
    %c24 = arith.constant 24 : index
    %138 = memref.load %arg3[%c24] : memref<36xf32, #tpu.memory_space<smem>>
    %139 = vector.broadcast %138 : f32 to vector<16x32xf32>
    %140 = arith.mulf %139, %129 : vector<16x32xf32>
    %141 = arith.addf %121, %140 : vector<16x32xf32>
    %c33 = arith.constant 33 : index
    %142 = memref.load %arg3[%c33] : memref<36xf32, #tpu.memory_space<smem>>
    %143 = vector.broadcast %142 : f32 to vector<16x32xf32>
    %144 = arith.mulf %143, %129 : vector<16x32xf32>
    %145 = arith.addf %125, %144 : vector<16x32xf32>
    %c2_i32_28 = arith.constant 2 : i32
    %146 = arith.addi %1, %c2_i32_28 : i32
    %c0_29 = arith.constant 0 : index
    %c0_30 = arith.constant 0 : index
    %147 = arith.index_cast %146 : i32 to index
    %c1_31 = arith.constant 1 : index
    %148 = vector.load %arg2[%c0_29, %c0_30, %147, %c1_31] : memref<1x1x34x34xf32, #tpu.memory_space<vmem>>, vector<1x1x16x32xf32>
    %149 = vector.shape_cast %148 : vector<1x1x16x32xf32> to vector<16x32xf32>
    %c7 = arith.constant 7 : index
    %150 = memref.load %arg3[%c7] : memref<36xf32, #tpu.memory_space<smem>>
    %151 = vector.broadcast %150 : f32 to vector<16x32xf32>
    %152 = arith.mulf %151, %149 : vector<16x32xf32>
    %153 = arith.addf %133, %152 : vector<16x32xf32>
    %c16 = arith.constant 16 : index
    %154 = memref.load %arg3[%c16] : memref<36xf32, #tpu.memory_space<smem>>
    %155 = vector.broadcast %154 : f32 to vector<16x32xf32>
    %156 = arith.mulf %155, %149 : vector<16x32xf32>
    %157 = arith.addf %137, %156 : vector<16x32xf32>
    %c25 = arith.constant 25 : index
    %158 = memref.load %arg3[%c25] : memref<36xf32, #tpu.memory_space<smem>>
    %159 = vector.broadcast %158 : f32 to vector<16x32xf32>
    %160 = arith.mulf %159, %149 : vector<16x32xf32>
    %161 = arith.addf %141, %160 : vector<16x32xf32>
    %c34 = arith.constant 34 : index
    %162 = memref.load %arg3[%c34] : memref<36xf32, #tpu.memory_space<smem>>
    %163 = vector.broadcast %162 : f32 to vector<16x32xf32>
    %164 = arith.mulf %163, %149 : vector<16x32xf32>
    %165 = arith.addf %145, %164 : vector<16x32xf32>
    %c2_i32_32 = arith.constant 2 : i32
    %166 = arith.addi %1, %c2_i32_32 : i32
    %c0_33 = arith.constant 0 : index
    %c0_34 = arith.constant 0 : index
    %167 = arith.index_cast %166 : i32 to index
    %c2_35 = arith.constant 2 : index
    %168 = vector.load %arg2[%c0_33, %c0_34, %167, %c2_35] : memref<1x1x34x34xf32, #tpu.memory_space<vmem>>, vector<1x1x16x32xf32>
    %169 = vector.shape_cast %168 : vector<1x1x16x32xf32> to vector<16x32xf32>
    %c8 = arith.constant 8 : index
    %170 = memref.load %arg3[%c8] : memref<36xf32, #tpu.memory_space<smem>>
    %171 = vector.broadcast %170 : f32 to vector<16x32xf32>
    %172 = arith.mulf %171, %169 : vector<16x32xf32>
    %173 = arith.addf %153, %172 : vector<16x32xf32>
    %c17 = arith.constant 17 : index
    %174 = memref.load %arg3[%c17] : memref<36xf32, #tpu.memory_space<smem>>
    %175 = vector.broadcast %174 : f32 to vector<16x32xf32>
    %176 = arith.mulf %175, %169 : vector<16x32xf32>
    %177 = arith.addf %157, %176 : vector<16x32xf32>
    %c26 = arith.constant 26 : index
    %178 = memref.load %arg3[%c26] : memref<36xf32, #tpu.memory_space<smem>>
    %179 = vector.broadcast %178 : f32 to vector<16x32xf32>
    %180 = arith.mulf %179, %169 : vector<16x32xf32>
    %181 = arith.addf %161, %180 : vector<16x32xf32>
    %c35 = arith.constant 35 : index
    %182 = memref.load %arg3[%c35] : memref<36xf32, #tpu.memory_space<smem>>
    %183 = vector.broadcast %182 : f32 to vector<16x32xf32>
    %184 = arith.mulf %183, %169 : vector<16x32xf32>
    %185 = arith.addf %165, %184 : vector<16x32xf32>
    %c0_36 = arith.constant 0 : index
    %c0_37 = arith.constant 0 : index
    %186 = vector.load %arg5[%c0_36, %c0_37] : memref<31x16xf32, #tpu.memory_space<vmem>>, vector<31x16xf32>
    %c0_38 = arith.constant 0 : index
    %187 = memref.load %arg4[%c0_38] : memref<4xf32, #tpu.memory_space<smem>>
    %188 = vector.broadcast %187 : f32 to vector<16x32xf32>
    %189 = arith.addf %173, %188 : vector<16x32xf32>
    %cst_39 = arith.constant 0.000000e+00 : f32
    %190 = vector.broadcast %cst_39 : f32 to vector<16x32xf32>
    %191 = arith.maximumf %189, %190 : vector<16x32xf32>
    %192 = vector.extract_strided_slice %191 {offsets = [0, 0], sizes = [16, 31], strides = [1, 1]} : vector<16x32xf32> to vector<16x31xf32>
    %193 = vector.extract_strided_slice %191 {offsets = [0, 1], sizes = [16, 31], strides = [1, 1]} : vector<16x32xf32> to vector<16x31xf32>
    %194 = arith.maximumf %192, %193 : vector<16x31xf32>
    %cst_40 = arith.constant dense<0.000000e+00> : vector<16x16xf32>
    %195 = tpu.matmul %194, %186, %cst_40 {dimension_numbers = #tpu.dot_dimension_numbers<[1], [0], [0], [1], [0, 0, 1, 1], [], []>} : vector<16x31xf32>, vector<31x16xf32>, vector<16x16xf32> -> vector<16x16xf32>
    %c1_41 = arith.constant 1 : index
    %196 = memref.load %arg4[%c1_41] : memref<4xf32, #tpu.memory_space<smem>>
    %197 = vector.broadcast %196 : f32 to vector<16x32xf32>
    %198 = arith.addf %177, %197 : vector<16x32xf32>
    %cst_42 = arith.constant 0.000000e+00 : f32
    %199 = vector.broadcast %cst_42 : f32 to vector<16x32xf32>
    %200 = arith.maximumf %198, %199 : vector<16x32xf32>
    %201 = vector.extract_strided_slice %200 {offsets = [0, 0], sizes = [16, 31], strides = [1, 1]} : vector<16x32xf32> to vector<16x31xf32>
    %202 = vector.extract_strided_slice %200 {offsets = [0, 1], sizes = [16, 31], strides = [1, 1]} : vector<16x32xf32> to vector<16x31xf32>
    %203 = arith.maximumf %201, %202 : vector<16x31xf32>
    %cst_43 = arith.constant dense<0.000000e+00> : vector<16x16xf32>
    %204 = tpu.matmul %203, %186, %cst_43 {dimension_numbers = #tpu.dot_dimension_numbers<[1], [0], [0], [1], [0, 0, 1, 1], [], []>} : vector<16x31xf32>, vector<31x16xf32>, vector<16x16xf32> -> vector<16x16xf32>
    %c2_44 = arith.constant 2 : index
    %205 = memref.load %arg4[%c2_44] : memref<4xf32, #tpu.memory_space<smem>>
    %206 = vector.broadcast %205 : f32 to vector<16x32xf32>
    %207 = arith.addf %181, %206 : vector<16x32xf32>
    %cst_45 = arith.constant 0.000000e+00 : f32
    %208 = vector.broadcast %cst_45 : f32 to vector<16x32xf32>
    %209 = arith.maximumf %207, %208 : vector<16x32xf32>
    %210 = vector.extract_strided_slice %209 {offsets = [0, 0], sizes = [16, 31], strides = [1, 1]} : vector<16x32xf32> to vector<16x31xf32>
    %211 = vector.extract_strided_slice %209 {offsets = [0, 1], sizes = [16, 31], strides = [1, 1]} : vector<16x32xf32> to vector<16x31xf32>
    %212 = arith.maximumf %210, %211 : vector<16x31xf32>
    %cst_46 = arith.constant dense<0.000000e+00> : vector<16x16xf32>
    %213 = tpu.matmul %212, %186, %cst_46 {dimension_numbers = #tpu.dot_dimension_numbers<[1], [0], [0], [1], [0, 0, 1, 1], [], []>} : vector<16x31xf32>, vector<31x16xf32>, vector<16x16xf32> -> vector<16x16xf32>
    %c3_47 = arith.constant 3 : index
    %214 = memref.load %arg4[%c3_47] : memref<4xf32, #tpu.memory_space<smem>>
    %215 = vector.broadcast %214 : f32 to vector<16x32xf32>
    %216 = arith.addf %185, %215 : vector<16x32xf32>
    %cst_48 = arith.constant 0.000000e+00 : f32
    %217 = vector.broadcast %cst_48 : f32 to vector<16x32xf32>
    %218 = arith.maximumf %216, %217 : vector<16x32xf32>
    %219 = vector.extract_strided_slice %218 {offsets = [0, 0], sizes = [16, 31], strides = [1, 1]} : vector<16x32xf32> to vector<16x31xf32>
    %220 = vector.extract_strided_slice %218 {offsets = [0, 1], sizes = [16, 31], strides = [1, 1]} : vector<16x32xf32> to vector<16x31xf32>
    %221 = arith.maximumf %219, %220 : vector<16x31xf32>
    %cst_49 = arith.constant dense<0.000000e+00> : vector<16x16xf32>
    %222 = tpu.matmul %221, %186, %cst_49 {dimension_numbers = #tpu.dot_dimension_numbers<[1], [0], [0], [1], [0, 0, 1, 1], [], []>} : vector<16x31xf32>, vector<31x16xf32>, vector<16x16xf32> -> vector<16x16xf32>
    %223 = tpu.concatenate %195, %204, %213, %222 in 1 : vector<16x16xf32>, vector<16x16xf32>, vector<16x16xf32>, vector<16x16xf32> -> vector<16x64xf32>
    %224 = vector.extract_strided_slice %223 {offsets = [0, 0], sizes = [15, 64], strides = [1, 1]} : vector<16x64xf32> to vector<15x64xf32>
    %225 = vector.extract_strided_slice %223 {offsets = [1, 0], sizes = [15, 64], strides = [1, 1]} : vector<16x64xf32> to vector<15x64xf32>
    %226 = arith.maximumf %224, %225 : vector<15x64xf32>
    %c0_50 = arith.constant 0 : index
    %c0_51 = arith.constant 0 : index
    %227 = vector.load %arg7[%c0_50, %c0_51] : memref<15x64xf32, #tpu.memory_space<vmem>>, vector<15x64xf32>
    tpu.vector_store %arg7[%c0_50, %c0_51], %226 {strides = array<i32>} : memref<15x64xf32, #tpu.memory_space<vmem>>, vector<15x64xf32>,
    %c0_52 = arith.constant 0 : index
    %c0_53 = arith.constant 0 : index
    %228 = tpu.strided_load %arg7[%c0_52, %c0_53] {strides = array<i32: 2, 1>} : memref<15x64xf32, #tpu.memory_space<vmem>>, vector<8x64xf32>
    %c0_54 = arith.constant 0 : index
    %c0_55 = arith.constant 0 : index
    %c0_56 = arith.constant 0 : index
    %229 = vector.load %arg6[%c0_54, %c0_55, %c0_56] : memref<1x8x64xf32, #tpu.memory_space<vmem>>, vector<1x8x64xf32>
    %230 = vector.shape_cast %229 : vector<1x8x64xf32> to vector<8x64xf32>
    %231 = vector.shape_cast %228 : vector<8x64xf32> to vector<1x8x64xf32>
    tpu.vector_store %arg6[%c0_54, %c0_55, %c0_56], %231 {strides = array<i32>} : memref<1x8x64xf32, #tpu.memory_space<vmem>>, vector<1x8x64xf32>,
    return
  }
  func.func @transform_0(%arg0: i32, %arg1: i32) -> (i32, i32, i32, i32) {
    %c0_i32 = arith.constant 0 : i32
    %c0_i32_0 = arith.constant 0 : i32
    %c0_i32_1 = arith.constant 0 : i32
    %c0_i32_2 = arith.constant 0 : i32
    return %arg0, %c0_i32, %c0_i32_0, %c0_i32_1 : i32, i32, i32, i32
  }
  func.func @transform_1(%arg0: i32, %arg1: i32) -> i32 {
    %c0_i32 = arith.constant 0 : i32
    %c0_i32_0 = arith.constant 0 : i32
    return %c0_i32 : i32
  }
  func.func @transform_2(%arg0: i32, %arg1: i32) -> i32 {
    %c0_i32 = arith.constant 0 : i32
    %c0_i32_0 = arith.constant 0 : i32
    return %c0_i32 : i32
  }
  func.func @transform_3(%arg0: i32, %arg1: i32) -> (i32, i32) {
    %c0_i32 = arith.constant 0 : i32
    %c0_i32_0 = arith.constant 0 : i32
    %c0_i32_1 = arith.constant 0 : i32
    return %c0_i32, %c0_i32_0 : i32, i32
  }
  func.func @transform_4(%arg0: i32, %arg1: i32) -> (i32, i32, i32) {
    %c0_i32 = arith.constant 0 : i32
    %c0_i32_0 = arith.constant 0 : i32
    return %arg0, %arg1, %c0_i32 : i32, i32, i32
  }
}

</mosaic_0001>

<llo_original>
// kernel: tpu_custom_call.1
$region0: #{tpu_custom_call.1}
  #allocation0 [shape = 'u32[]', space=smem, size = 0x4, offset = 0x4, fixed_abs, tag = 'smem constant byte address 0x4 - core index']
  #allocation1 [shape = 'u32[72,128]{1,0:T(1,128)}', space=vmem, size = 0x9000, scoped, tag = 'internal scratch']
  #allocation2 [shape = 'f32[15,64]{1,0:T(8,128)}', space=vmem, size = 0x2000, scoped, tag = 'scratch operand']
  %s0 = inlined_call_operand.vmem [shape: f32[2,1,34,34], index: 0, kind: input, shape index: {}]
  %s1 = inlined_call_operand.vmem [shape: f32[36], index: 1, kind: input, shape index: {}]
  %s2 = inlined_call_operand.vmem [shape: f32[4], index: 2, kind: input, shape index: {}]
  %s3 = inlined_call_operand.vmem [shape: f32[31,16], index: 3, kind: input, shape index: {}]
  %s4 = inlined_call_operand.hbm [shape: f32[2,16,64], index: 4, kind: output, shape index: {}]
  %s5 = sld [smem:[#allocation0]]
  $region57: #{tpu_custom_call.1} parent=0
    _
  %s7 = ssub.s32 1, %s5
  %s8 = scalar_select 0, %s7, %s5
  $region1: #{tpu_custom_call.1} parent=0
    #allocation3 [shape = 'u8[512]{0}', space=smem, size = 0x200, scoped, tag = 'input window, operand 1, single buffered']
    #allocation4 [shape = 's32[2]{0}', space=sflag, size = 0x8, scoped, tag = 'scoped memory for tpu_custom_call.1']
    #allocation5 [shape = 's32[2]{0}', space=sflag, size = 0x8, scoped, tag = 'scoped memory for tpu_custom_call.1']
    #allocation6 [shape = 'u8[512]{0}', space=smem, size = 0x200, scoped, tag = 'input window, operand 2, single buffered']
    #allocation7 [shape = 's32[1]{0}', space=sflag, size = 0x4, scoped, tag = 'scoped memory for tpu_custom_call.1']
    #allocation8 [shape = 'u8[8192]{0}', space=vmem, size = 0x2000, scoped, tag = 'output window, operand 0']
    %9 = vsyncpa [#allocation5], 0
    %10 = vsyncpa [#allocation7], 0
    %11 = vsyncpa [#allocation4], 0
    %s12 = scalar_lea.sflag [#allocation4], 1
    %13 = vsyncpa %s12, 0
    loop: start=0, step=1, limit=6
    $region2: #{tpu_custom_call.1} parent=1 // loop_pre_header
      _
    $region3: #{tpu_custom_call.1} parent=1 // loop_header
      %s15 = sphi 0, %s19
      %p16 = scmp.ge.s32.totalorder %s15, 6
      %s22 = sphi 0, %s34
      %s23 = sphi 0, %s30
      %s24 = sphi 0, %s22
      %s25 = sphi 0, %s23
      %s26 = sphi 0, %s24
      %s27 = sphi 0, %s25
      %s37 = sphi 0, %s39
      %s40 = sphi 0, %s37
      %s41 = sphi 0, %s40
      %s57 = sphi 0, %s41
      %s61 = sphi 0, %s61
      %s63 = sphi 0, %s61
      %s64 = sphi 0, %s63
      %s78 = sphi 0, %s64
      %s82 = sphi 0, %s82
      %s84 = sphi 0, %s82
      %s85 = sphi 0, %s84
      %s99 = sphi 0, %s85
      %s103 = sphi 0, %s103
      %s105 = sphi 0, %s103
      %s106 = sphi 0, %s105
      %s120 = sphi 0, %s106
      %s128 = sphi 0, %s130
      %s131 = sphi 0, %s128
      %s132 = sphi 0, %s131
      %s148 = sphi 0, %s132
    $region4: #{tpu_custom_call.1} parent=1 // loop_header_branch
      %18 = sbr.rel (%p16) target = $region8
    $region5: #{tpu_custom_call.1} parent=1 // loop_body
      %s20 = ssub.s32 %s15, 1
      %s21 = ssub.s32 %s15, 2
      %s28 = sadd.s32 1, %s23
      %p29 = scmp.ge.s32.totalorder %s28, 2
      %s30 = scalar_select %p29, 0, %s28
      %s31 = sadd.s32 1, %s22
      %s32 = scalar_select %p29, %s31, %s22
      %p33 = scmp.ge.s32.totalorder %s32, 2
      %s34 = scalar_select %p33, 0, %s32
      %s35 = ssub.s32 %s22, %s34
      %p36 = scmp.eq.s32.totalorder %s35, 0
      %s38 = sadd.s32 %s37, 1
      %s39 = scalar_select %p36, %s37, %s38
      %p42 = pneg %p36
      %p43 = scmp.eq.s32.totalorder %s15, 3
      %p44 = por %p42, %p43
      %p45 = scmp.ne.s32.totalorder %s37, %s40
      %p46 = scmp.eq.s32.totalorder %s15, 0
      %p47 = por %p45, %p46
      %p48 = scmp.ne.s32.totalorder %s37, %s40
      %p49 = scmp.eq.s32.totalorder %s20, 3
      %p50 = por %p48, %p49
      %p51 = scmp.ne.s32.totalorder %s40, %s41
      %p52 = scmp.eq.s32.totalorder %s20, 0
      %p53 = por %p51, %p52
      %p54 = scmp.ne.s32.totalorder %s40, %s41
      %p55 = scmp.eq.s32.totalorder %s21, 3
      %p56 = por %p54, %p55
      %p58 = scmp.ne.s32.totalorder %s41, %s57
      %p59 = scmp.eq.s32.totalorder %s21, 0
      %p60 = por %p58, %p59
      %s62 = sadd.s32 %s61, 1
      %p65 = scmp.eq.s32.totalorder %s15, 3
      %p66 = scmp.ne.s32.totalorder %s61, %s63
      %p67 = scmp.eq.s32.totalorder %s15, 0
      %p68 = por %p66, %p67
      %p69 = scmp.ne.s32.totalorder %s61, %s63
      %p70 = scmp.eq.s32.totalorder %s20, 3
      %p71 = por %p69, %p70
      %p72 = scmp.ne.s32.totalorder %s63, %s64
      %p73 = scmp.eq.s32.totalorder %s20, 0
      %p74 = por %p72, %p73
      %p75 = scmp.ne.s32.totalorder %s63, %s64
      %p76 = scmp.eq.s32.totalorder %s21, 3
      %p77 = por %p75, %p76
      %p79 = scmp.ne.s32.totalorder %s64, %s78
      %p80 = scmp.eq.s32.totalorder %s21, 0
      %p81 = por %p79, %p80
      %s83 = sadd.s32 %s82, 1
      %p86 = scmp.eq.s32.totalorder %s15, 3
      %p87 = scmp.ne.s32.totalorder %s82, %s84
      %p88 = scmp.eq.s32.totalorder %s15, 0
      %p89 = por %p87, %p88
      %p90 = scmp.ne.s32.totalorder %s82, %s84
      %p91 = scmp.eq.s32.totalorder %s20, 3
      %p92 = por %p90, %p91
      %p93 = scmp.ne.s32.totalorder %s84, %s85
      %p94 = scmp.eq.s32.totalorder %s20, 0
      %p95 = por %p93, %p94
      %p96 = scmp.ne.s32.totalorder %s84, %s85
      %p97 = scmp.eq.s32.totalorder %s21, 3
      %p98 = por %p96, %p97
      %p100 = scmp.ne.s32.totalorder %s85, %s99
      %p101 = scmp.eq.s32.totalorder %s21, 0
      %p102 = por %p100, %p101
      %s104 = sadd.s32 %s103, 1
      %p107 = scmp.eq.s32.totalorder %s15, 3
      %p108 = scmp.ne.s32.totalorder %s103, %s105
      %p109 = scmp.eq.s32.totalorder %s15, 0
      %p110 = por %p108, %p109
      %p111 = scmp.ne.s32.totalorder %s103, %s105
      %p112 = scmp.eq.s32.totalorder %s20, 3
      %p113 = por %p111, %p112
      %p114 = scmp.ne.s32.totalorder %s105, %s106
      %p115 = scmp.eq.s32.totalorder %s20, 0
      %p116 = por %p114, %p115
      %p117 = scmp.ne.s32.totalorder %s105, %s106
      %p118 = scmp.eq.s32.totalorder %s21, 3
      %p119 = por %p117, %p118
      %p121 = scmp.ne.s32.totalorder %s106, %s120
      %p122 = scmp.eq.s32.totalorder %s21, 0
      %p123 = por %p121, %p122
      %s124 = ssub.s32 %s22, %s34
      %s125 = ssub.s32 %s23, %s30
      %s126 = sor.u32 %s124, %s125
      %p127 = scmp.eq.s32.totalorder %s126, 0
      %s129 = sadd.s32 %s128, 1
      %s130 = scalar_select %p127, %s128, %s129
      %p133 = pneg %p127
      %p134 = scmp.eq.s32.totalorder %s15, 3
      %p135 = por %p133, %p134
      %p136 = scmp.ne.s32.totalorder %s128, %s131
      %p137 = scmp.eq.s32.totalorder %s15, 0
      %p138 = por %p136, %p137
      %p139 = scmp.ne.s32.totalorder %s128, %s131
      %p140 = scmp.eq.s32.totalorder %s20, 3
      %p141 = por %p139, %p140
      %p142 = scmp.ne.s32.totalorder %s131, %s132
      %p143 = scmp.eq.s32.totalorder %s20, 0
      %p144 = por %p142, %p143
      %p145 = scmp.ne.s32.totalorder %s131, %s132
      %p146 = scmp.eq.s32.totalorder %s21, 3
      %p147 = por %p145, %p146
      %p149 = scmp.ne.s32.totalorder %s132, %s148
      %p150 = scmp.eq.s32.totalorder %s21, 0
      %p151 = por %p149, %p150
      %p152 = scmp.le.s32.totalorder 1, %s15
      %p153 = scmp.lt.s32.totalorder %s15, 5
      %p154 = pnand %p152, %p153
      %p155 = pneg %p154
      // Predicated region
      $region9: #{tpu_custom_call.1} parent=5 // pred_check
        _
      $region10: #{tpu_custom_call.1} parent=5 // pred_check_branch
        %157 = sbr.rel (%p154) target = $region12
      $region11: #{tpu_custom_call.1} parent=5 // pred_region
        %s158 = ssub.s32 %s15, 1
        // Predicated region
        $region13: #{tpu_custom_call.1} parent=11 // pred_check
          %p159 = pneg %p74
        $region14: #{tpu_custom_call.1} parent=11 // pred_check_branch
          %161 = sbr.rel (%p159) target = $region16
        $region15: #{tpu_custom_call.1} parent=11 // pred_region
          %163 = vsyncadd [#allocation5], 0
          %s165 = sshll.u32 %s1, 4
          %s166 = int_to_ptr.vmem [resolvable:$true] %s165
          %168 = dma.vmem_to_smem %s166, 16, [#allocation3], [#allocation5]
        $region16: #{tpu_custom_call.1} parent=11 // pred_fallthru
          _
        // Predicated region
        $region17: #{tpu_custom_call.1} parent=11 // pred_check
          %p169 = pneg %p95
        $region18: #{tpu_custom_call.1} parent=11 // pred_check_branch
          %171 = sbr.rel (%p169) target = $region20
        $region19: #{tpu_custom_call.1} parent=11 // pred_region
          %173 = vsyncadd [#allocation7], 0
          %s175 = sshll.u32 %s2, 4
          %s176 = int_to_ptr.vmem [resolvable:$true] %s175
          %178 = dma.vmem_to_smem %s176, 16, [#allocation6], [#allocation7]
        $region20: #{tpu_custom_call.1} parent=11 // pred_fallthru
          _
        // Predicated region
        $region21: #{tpu_custom_call.1} parent=11 // pred_check
          %p179 = pneg %p116
        $region22: #{tpu_custom_call.1} parent=11 // pred_check_branch
          %181 = sbr.rel (%p179) target = $region24
        $region23: #{tpu_custom_call.1} parent=11 // pred_region
          _
        $region24: #{tpu_custom_call.1} parent=11 // pred_fallthru
          _
      $region12: #{tpu_custom_call.1} parent=5 // pred_fallthru
        _
      %p182 = scmp.lt.s32.totalorder %s15, 4
      // Predicated region
      $region25: #{tpu_custom_call.1} parent=5 // pred_check
        %p183 = pneg %p182
      $region26: #{tpu_custom_call.1} parent=5 // pred_check_branch
        %185 = sbr.rel (%p183) target = $region28
      $region27: #{tpu_custom_call.1} parent=5 // pred_region
        // Predicated region
        $region29: #{tpu_custom_call.1} parent=27 // pred_check
          %p186 = pneg %p47
        $region30: #{tpu_custom_call.1} parent=27 // pred_check_branch
          %188 = sbr.rel (%p186) target = $region32
        $region31: #{tpu_custom_call.1} parent=27 // pred_region
          %p189 = scmp.lt.s32.totalorder %s22, 1
          %s190 = scalar_select %p189, %s22, 1
          %s191 = smul.addr %s190, 5
          %s192 = smul.addr %s191, 8
          %s193 = scalar_lea.vmem %s0, %s192
        $region32: #{tpu_custom_call.1} parent=27 // pred_fallthru
          _
      $region28: #{tpu_custom_call.1} parent=5 // pred_fallthru
        _
      %p194 = scmp.le.s32.totalorder 1, %s15
      %p195 = scmp.lt.s32.totalorder %s15, 5
      %p196 = pnand %p194, %p195
      %p197 = pneg %p196
      // Predicated region
      $region33: #{tpu_custom_call.1} parent=5 // pred_check
        _
      $region34: #{tpu_custom_call.1} parent=5 // pred_check_branch
        %199 = sbr.rel (%p196) target = $region36
      $region35: #{tpu_custom_call.1} parent=5 // pred_region
        %s200 = ssub.s32 %s15, 1
        // Predicated region
        $region37: #{tpu_custom_call.1} parent=35 // pred_check
          %p201 = pneg %p74
        $region38: #{tpu_custom_call.1} parent=35 // pred_check_branch
          %203 = sbr.rel (%p201) target = $region40
        $region39: #{tpu_custom_call.1} parent=35 // pred_region
          %205 = dma.done [#allocation5], 16
        $region40: #{tpu_custom_call.1} parent=35 // pred_fallthru
          _
        // Predicated region
        $region41: #{tpu_custom_call.1} parent=35 // pred_check
          %p206 = pneg %p95
        $region42: #{tpu_custom_call.1} parent=35 // pred_check_branch
          %208 = sbr.rel (%p206) target = $region44
        $region43: #{tpu_custom_call.1} parent=35 // pred_region
          %210 = dma.done [#allocation7], 16
        $region44: #{tpu_custom_call.1} parent=35 // pred_fallthru
          _
        %211 = sfence
        %p212 = scmp.lt.s32.totalorder %s24, 1
        %s213 = scalar_select %p212, %s24, 1
        %s214 = smul.addr %s213, 5
        %s215 = smul.addr %s214, 8
        %s216 = scalar_lea.vmem %s0, %s215
        %p217 = pneg %p53
        %p218 = pneg %p50
        %p219 = pneg %p74
        %p220 = pneg %p71
        %p221 = pneg %p95
        %p222 = pneg %p92
        %p223 = pneg %p116
        %p224 = pneg %p113
        %p225 = pneg %p144
        %p226 = pneg %p141
        %s227 = sand.u32 %s131, 1
        %s228 = scalar_lea.sflag [#allocation4], %s227
        %s229 = sand.u32 %s131, 1
        %s230 = smul.addr %s229, 8
        %s231 = scalar_lea.vmem [#allocation8], %s230
        %p232 = scmp.lt.s32.totalorder %s24, 1
        %s233 = scalar_select %p232, %s24, 1
        %s234 = smul.addr %s233, 5
        %s235 = smul.addr %s234, 8
        %s236 = scalar_lea.vmem %s0, %s235
        %s237 = smul.u32 %s25, 16
        %s238 = scalar_lea.vmem %s236, %s237
        %v239 = vld [vmem:[%s238] sm:$0xff]
        %v240 = vld [vmem:[%s238 + $0x8] sm:$0xff]
        %s241 = sld [smem:[#allocation3]]
        %v242 = vstv %s241
        %v243 = vmul.f32 %v242, %v239
        %v244 = vmul.f32 %v242, %v240
        %v245 = vadd.f32 %v243, 0.0
        %v246 = vadd.f32 %v244, 0.0
        %s247 = sld [smem:[#allocation3 + $0x9]]
        %v248 = vstv %s247
        %v249 = vmul.f32 %v248, %v239
        %v250 = vmul.f32 %v248, %v240
        %v251 = vadd.f32 %v249, 0.0
        %v252 = vadd.f32 %v250, 0.0
        %s253 = sld [smem:[#allocation3 + $0x12]]
        %v254 = vstv %s253
        %v255 = vmul.f32 %v254, %v239
        %v256 = vmul.f32 %v254, %v240
        %v257 = vadd.f32 %v255, 0.0
        %v258 = vadd.f32 %v256, 0.0
        %s259 = sld [smem:[#allocation3 + $0x1b]]
        %v260 = vstv %s259
        %v261 = vmul.f32 %v260, %v239
        %v262 = vmul.f32 %v260, %v240
        %v263 = vadd.f32 %v261, 0.0
        %v264 = vadd.f32 %v262, 0.0
        %s265 = sld [smem:[#allocation3 + $0x1]]
        %v266 = vstv %s265
        %v267 = vmul.f32 %v266, %v239
        %v268 = vmul.f32 %v266, %v240
        %271 = vrot.lane.b32.xlu0 %v267, 127
        %v272 = vpop.permute.xlu0 %271
        %273 = vrot.lane.b32.xlu0 %v268, 127
        %v274 = vpop.permute.xlu0 %273
        %v277 = vadd.f32 %v245, %v272
        %v278 = vadd.f32 %v246, %v274
        %s279 = sld [smem:[#allocation3 + $0xa]]
        %v280 = vstv %s279
        %v281 = vmul.f32 %v280, %v239
        %v282 = vmul.f32 %v280, %v240
        %285 = vrot.lane.b32.xlu0 %v281, 127
        %v286 = vpop.permute.xlu0 %285
        %287 = vrot.lane.b32.xlu0 %v282, 127
        %v288 = vpop.permute.xlu0 %287
        %v291 = vadd.f32 %v251, %v286
        %v292 = vadd.f32 %v252, %v288
        %s293 = sld [smem:[#allocation3 + $0x13]]
        %v294 = vstv %s293
        %v295 = vmul.f32 %v294, %v239
        %v296 = vmul.f32 %v294, %v240
        %299 = vrot.lane.b32.xlu0 %v295, 127
        %v300 = vpop.permute.xlu0 %299
        %301 = vrot.lane.b32.xlu0 %v296, 127
        %v302 = vpop.permute.xlu0 %301
        %v305 = vadd.f32 %v257, %v300
        %v306 = vadd.f32 %v258, %v302
        %s307 = sld [smem:[#allocation3 + $0x1c]]
        %v308 = vstv %s307
        %v309 = vmul.f32 %v308, %v239
        %v310 = vmul.f32 %v308, %v240
        %313 = vrot.lane.b32.xlu0 %v309, 127
        %v314 = vpop.permute.xlu0 %313
        %315 = vrot.lane.b32.xlu0 %v310, 127
        %v316 = vpop.permute.xlu0 %315
        %v319 = vadd.f32 %v263, %v314
        %v320 = vadd.f32 %v264, %v316
        %s321 = sld [smem:[#allocation3 + $0x2]]
        %v322 = vstv %s321
        %v323 = vmul.f32 %v322, %v239
        %v324 = vmul.f32 %v322, %v240
        %327 = vrot.lane.b32.xlu0 %v323, 126
        %v328 = vpop.permute.xlu0 %327
        %329 = vrot.lane.b32.xlu0 %v324, 126
        %v330 = vpop.permute.xlu0 %329
        %v333 = vadd.f32 %v277, %v328
        %v334 = vadd.f32 %v278, %v330
        %s335 = sld [smem:[#allocation3 + $0xb]]
        %v336 = vstv %s335
        %v337 = vmul.f32 %v336, %v239
        %v338 = vmul.f32 %v336, %v240
        %341 = vrot.lane.b32.xlu0 %v337, 126
        %v342 = vpop.permute.xlu0 %341
        %343 = vrot.lane.b32.xlu0 %v338, 126
        %v344 = vpop.permute.xlu0 %343
        %v347 = vadd.f32 %v291, %v342
        %v348 = vadd.f32 %v292, %v344
        %s349 = sld [smem:[#allocation3 + $0x14]]
        %v350 = vstv %s349
        %v351 = vmul.f32 %v350, %v239
        %v352 = vmul.f32 %v350, %v240
        %355 = vrot.lane.b32.xlu0 %v351, 126
        %v356 = vpop.permute.xlu0 %355
        %357 = vrot.lane.b32.xlu0 %v352, 126
        %v358 = vpop.permute.xlu0 %357
        %v361 = vadd.f32 %v305, %v356
        %v362 = vadd.f32 %v306, %v358
        %s363 = sld [smem:[#allocation3 + $0x1d]]
        %v364 = vstv %s363
        %v365 = vmul.f32 %v364, %v239
        %v366 = vmul.f32 %v364, %v240
        %369 = vrot.lane.b32.xlu0 %v365, 126
        %v370 = vpop.permute.xlu0 %369
        %371 = vrot.lane.b32.xlu0 %v366, 126
        %v372 = vpop.permute.xlu0 %371
        %v375 = vadd.f32 %v319, %v370
        %v376 = vadd.f32 %v320, %v372
        %s377 = sadd.s32 %s237, 1
        %s378 = scalar_lea.vmem %s236, %s377
        %v379 = vld [vmem:[%s378] sm:$0xff]
        %v380 = vld [vmem:[%s378 + $0x8] sm:$0xff]
        %s381 = sld [smem:[#allocation3 + $0x3]]
        %v382 = vstv %s381
        %v383 = vmul.f32 %v382, %v379
        %v384 = vmul.f32 %v382, %v380
        %v385 = vadd.f32 %v333, %v383
        %v386 = vadd.f32 %v334, %v384
        %s387 = sld [smem:[#allocation3 + $0xc]]
        %v388 = vstv %s387
        %v389 = vmul.f32 %v388, %v379
        %v390 = vmul.f32 %v388, %v380
        %v391 = vadd.f32 %v347, %v389
        %v392 = vadd.f32 %v348, %v390
        %s393 = sld [smem:[#allocation3 + $0x15]]
        %v394 = vstv %s393
        %v395 = vmul.f32 %v394, %v379
        %v396 = vmul.f32 %v394, %v380
        %v397 = vadd.f32 %v361, %v395
        %v398 = vadd.f32 %v362, %v396
        %s399 = sld [smem:[#allocation3 + $0x1e]]
        %v400 = vstv %s399
        %v401 = vmul.f32 %v400, %v379
        %v402 = vmul.f32 %v400, %v380
        %v403 = vadd.f32 %v375, %v401
        %v404 = vadd.f32 %v376, %v402
        %s405 = sld [smem:[#allocation3 + $0x4]]
        %v406 = vstv %s405
        %v407 = vmul.f32 %v406, %v379
        %v408 = vmul.f32 %v406, %v380
        %411 = vrot.lane.b32.xlu0 %v407, 127
        %v412 = vpop.permute.xlu0 %411
        %413 = vrot.lane.b32.xlu0 %v408, 127
        %v414 = vpop.permute.xlu0 %413
        %v417 = vadd.f32 %v385, %v412
        %v418 = vadd.f32 %v386, %v414
        %s419 = sld [smem:[#allocation3 + $0xd]]
        %v420 = vstv %s419
        %v421 = vmul.f32 %v420, %v379
        %v422 = vmul.f32 %v420, %v380
        %425 = vrot.lane.b32.xlu0 %v421, 127
        %v426 = vpop.permute.xlu0 %425
        %427 = vrot.lane.b32.xlu0 %v422, 127
        %v428 = vpop.permute.xlu0 %427
        %v431 = vadd.f32 %v391, %v426
        %v432 = vadd.f32 %v392, %v428
        %s433 = sld [smem:[#allocation3 + $0x16]]
        %v434 = vstv %s433
        %v435 = vmul.f32 %v434, %v379
        %v436 = vmul.f32 %v434, %v380
        %439 = vrot.lane.b32.xlu0 %v435, 127
        %v440 = vpop.permute.xlu0 %439
        %441 = vrot.lane.b32.xlu0 %v436, 127
        %v442 = vpop.permute.xlu0 %441
        %v445 = vadd.f32 %v397, %v440
        %v446 = vadd.f32 %v398, %v442
        %s447 = sld [smem:[#allocation3 + $0x1f]]
        %v448 = vstv %s447
        %v449 = vmul.f32 %v448, %v379
        %v450 = vmul.f32 %v448, %v380
        %453 = vrot.lane.b32.xlu0 %v449, 127
        %v454 = vpop.permute.xlu0 %453
        %455 = vrot.lane.b32.xlu0 %v450, 127
        %v456 = vpop.permute.xlu0 %455
        %v459 = vadd.f32 %v403, %v454
        %v460 = vadd.f32 %v404, %v456
        %s461 = sld [smem:[#allocation3 + $0x5]]
        %v462 = vstv %s461
        %v463 = vmul.f32 %v462, %v379
        %v464 = vmul.f32 %v462, %v380
        %467 = vrot.lane.b32.xlu0 %v463, 126
        %v468 = vpop.permute.xlu0 %467
        %469 = vrot.lane.b32.xlu0 %v464, 126
        %v470 = vpop.permute.xlu0 %469
        %v473 = vadd.f32 %v417, %v468
        %v474 = vadd.f32 %v418, %v470
        %s475 = sld [smem:[#allocation3 + $0xe]]
        %v476 = vstv %s475
        %v477 = vmul.f32 %v476, %v379
        %v478 = vmul.f32 %v476, %v380
        %481 = vrot.lane.b32.xlu0 %v477, 126
        %v482 = vpop.permute.xlu0 %481
        %483 = vrot.lane.b32.xlu0 %v478, 126
        %v484 = vpop.permute.xlu0 %483
        %v487 = vadd.f32 %v431, %v482
        %v488 = vadd.f32 %v432, %v484
        %s489 = sld [smem:[#allocation3 + $0x17]]
        %v490 = vstv %s489
        %v491 = vmul.f32 %v490, %v379
        %v492 = vmul.f32 %v490, %v380
        %495 = vrot.lane.b32.xlu0 %v491, 126
        %v496 = vpop.permute.xlu0 %495
        %497 = vrot.lane.b32.xlu0 %v492, 126
        %v498 = vpop.permute.xlu0 %497
        %v501 = vadd.f32 %v445, %v496
        %v502 = vadd.f32 %v446, %v498
        %s503 = sld [smem:[#allocation3 + $0x20]]
        %v504 = vstv %s503
        %v505 = vmul.f32 %v504, %v379
        %v506 = vmul.f32 %v504, %v380
        %509 = vrot.lane.b32.xlu0 %v505, 126
        %v510 = vpop.permute.xlu0 %509
        %511 = vrot.lane.b32.xlu0 %v506, 126
        %v512 = vpop.permute.xlu0 %511
        %v515 = vadd.f32 %v459, %v510
        %v516 = vadd.f32 %v460, %v512
        %s517 = sadd.s32 %s237, 2
        %s518 = scalar_lea.vmem %s236, %s517
        %v519 = vld [vmem:[%s518] sm:$0xff]
        %v520 = vld [vmem:[%s518 + $0x8] sm:$0xff]
        %s521 = sld [smem:[#allocation3 + $0x6]]
        %v522 = vstv %s521
        %v523 = vmul.f32 %v522, %v519
        %v524 = vmul.f32 %v522, %v520
        %v525 = vadd.f32 %v473, %v523
        %v526 = vadd.f32 %v474, %v524
        %s527 = sld [smem:[#allocation3 + $0xf]]
        %v528 = vstv %s527
        %v529 = vmul.f32 %v528, %v519
        %v530 = vmul.f32 %v528, %v520
        %v531 = vadd.f32 %v487, %v529
        %v532 = vadd.f32 %v488, %v530
        %s533 = sld [smem:[#allocation3 + $0x18]]
        %v534 = vstv %s533
        %v535 = vmul.f32 %v534, %v519
        %v536 = vmul.f32 %v534, %v520
        %v537 = vadd.f32 %v501, %v535
        %v538 = vadd.f32 %v502, %v536
        %s539 = sld [smem:[#allocation3 + $0x21]]
        %v540 = vstv %s539
        %v541 = vmul.f32 %v540, %v519
        %v542 = vmul.f32 %v540, %v520
        %v543 = vadd.f32 %v515, %v541
        %v544 = vadd.f32 %v516, %v542
        %s545 = sld [smem:[#allocation3 + $0x7]]
        %v546 = vstv %s545
        %v547 = vmul.f32 %v546, %v519
        %v548 = vmul.f32 %v546, %v520
        %551 = vrot.lane.b32.xlu0 %v547, 127
        %v552 = vpop.permute.xlu0 %551
        %553 = vrot.lane.b32.xlu0 %v548, 127
        %v554 = vpop.permute.xlu0 %553
        %v557 = vadd.f32 %v525, %v552
        %v558 = vadd.f32 %v526, %v554
        %s559 = sld [smem:[#allocation3 + $0x10]]
        %v560 = vstv %s559
        %v561 = vmul.f32 %v560, %v519
        %v562 = vmul.f32 %v560, %v520
        %565 = vrot.lane.b32.xlu0 %v561, 127
        %v566 = vpop.permute.xlu0 %565
        %567 = vrot.lane.b32.xlu0 %v562, 127
        %v568 = vpop.permute.xlu0 %567
        %v571 = vadd.f32 %v531, %v566
        %v572 = vadd.f32 %v532, %v568
        %s573 = sld [smem:[#allocation3 + $0x19]]
        %v574 = vstv %s573
        %v575 = vmul.f32 %v574, %v519
        %v576 = vmul.f32 %v574, %v520
        %579 = vrot.lane.b32.xlu0 %v575, 127
        %v580 = vpop.permute.xlu0 %579
        %581 = vrot.lane.b32.xlu0 %v576, 127
        %v582 = vpop.permute.xlu0 %581
        %v585 = vadd.f32 %v537, %v580
        %v586 = vadd.f32 %v538, %v582
        %s587 = sld [smem:[#allocation3 + $0x22]]
        %v588 = vstv %s587
        %v589 = vmul.f32 %v588, %v519
        %v590 = vmul.f32 %v588, %v520
        %593 = vrot.lane.b32.xlu0 %v589, 127
        %v594 = vpop.permute.xlu0 %593
        %595 = vrot.lane.b32.xlu0 %v590, 127
        %v596 = vpop.permute.xlu0 %595
        %v599 = vadd.f32 %v543, %v594
        %v600 = vadd.f32 %v544, %v596
        %s601 = sld [smem:[#allocation3 + $0x8]]
        %v602 = vstv %s601
        %v603 = vmul.f32 %v602, %v519
        %v604 = vmul.f32 %v602, %v520
        %607 = vrot.lane.b32.xlu0 %v603, 126
        %v608 = vpop.permute.xlu0 %607
        %609 = vrot.lane.b32.xlu0 %v604, 126
        %v610 = vpop.permute.xlu0 %609
        %v613 = vadd.f32 %v557, %v608
        %v614 = vadd.f32 %v558, %v610
        %s615 = sld [smem:[#allocation3 + $0x11]]
        %v616 = vstv %s615
        %v617 = vmul.f32 %v616, %v519
        %v618 = vmul.f32 %v616, %v520
        %621 = vrot.lane.b32.xlu0 %v617, 126
        %v622 = vpop.permute.xlu0 %621
        %623 = vrot.lane.b32.xlu0 %v618, 126
        %v624 = vpop.permute.xlu0 %623
        %v627 = vadd.f32 %v571, %v622
        %v628 = vadd.f32 %v572, %v624
        %s629 = sld [smem:[#allocation3 + $0x1a]]
        %v630 = vstv %s629
        %v631 = vmul.f32 %v630, %v519
        %v632 = vmul.f32 %v630, %v520
        %635 = vrot.lane.b32.xlu0 %v631, 126
        %v636 = vpop.permute.xlu0 %635
        %637 = vrot.lane.b32.xlu0 %v632, 126
        %v638 = vpop.permute.xlu0 %637
        %v641 = vadd.f32 %v585, %v636
        %v642 = vadd.f32 %v586, %v638
        %s643 = sld [smem:[#allocation3 + $0x23]]
        %v644 = vstv %s643
        %v645 = vmul.f32 %v644, %v519
        %v646 = vmul.f32 %v644, %v520
        %649 = vrot.lane.b32.xlu0 %v645, 126
        %v650 = vpop.permute.xlu0 %649
        %651 = vrot.lane.b32.xlu0 %v646, 126
        %v652 = vpop.permute.xlu0 %651
        %v655 = vadd.f32 %v599, %v650
        %v656 = vadd.f32 %v600, %v652
        %v657 = vld [vmem:[%s3] sm:$0xff]
        %v658 = vld [vmem:[%s3 + $0x8] sm:$0xff]
        %v659 = vld [vmem:[%s3 + $0x10] sm:$0xff]
        %v660 = vld [vmem:[%s3 + $0x18] sm:$0x7f]
        %s661 = sld [smem:[#allocation6]]
        %v662 = vstv %s661
        %v663 = vadd.f32 %v613, %v662
        %v664 = vadd.f32 %v614, %v662
        %v665 = vmax.f32 %v663, 0.0
        %v666 = vmax.f32 %v664, 0.0
        %669 = vrot.lane.b32.xlu0 %v665, 127
        %v670 = vpop.permute.xlu0 %669
        %671 = vrot.lane.b32.xlu0 %v666, 127
        %v672 = vpop.permute.xlu0 %671
        %v675 = vmax.f32 %v665, %v670
        %v676 = vmax.f32 %v666, %v672
        %vm677 = vcmask 252928
        %v679 = vsel %vm677, %v675, 0
        %v682 = vsel %vm677, %v676, 0
        %vm684 = vcmask 1046528
        %v686 = vsel %vm684, %v660, 0
        %688 = vmatpush.msra.mxu0 0.0
        %689 = vmatpush.msra.mxu0 0.0
        %690 = vmatpush.msra.mxu0 0.0
        %691 = vmatpush.msra.mxu0 0.0
        %692 = vmatpush.msra.mxu0 0.0
        %693 = vmatpush.msra.mxu0 0.0
        %694 = vmatpush.msra.mxu0 0.0
        %695 = vmatpush.msra.mxu0 0.0
        %696 = vmatpush.msra.mxu0 0.0
        %697 = vmatpush.msra.mxu0 0.0
        %698 = vmatpush.msra.mxu0 0.0
        %699 = vmatpush.msra.mxu0 0.0
        %700 = vmatpush.msra.mxu0 %v686
        %701 = vmatpush.msra.mxu0 %v659
        %702 = vmatpush.msra.mxu0 %v658
        %703 = vmatpush.msra.mxu0 %v657
        %704 = vmatmul.f32.gmra.mxu0 %v679
        %v705 = vpop.f32.mrf.mxu0
        %v706 = vadd.f32 0.0, %v705
        %707 = vmatmul.f32.gmra.mxu0 %v682
        %v708 = vpop.f32.mrf.mxu0
        %v709 = vadd.f32 0.0, %v708
        %710 = vdwg.mxu0
        %s711 = sld [smem:[#allocation6 + $0x1]]
        %v712 = vstv %s711
        %v713 = vadd.f32 %v627, %v712
        %v714 = vadd.f32 %v628, %v712
        %v715 = vmax.f32 %v713, 0.0
        %v716 = vmax.f32 %v714, 0.0
        %719 = vrot.lane.b32.xlu0 %v715, 127
        %v720 = vpop.permute.xlu0 %719
        %721 = vrot.lane.b32.xlu0 %v716, 127
        %v722 = vpop.permute.xlu0 %721
        %v725 = vmax.f32 %v715, %v720
        %v726 = vmax.f32 %v716, %v722
        %v728 = vsel %vm677, %v725, 0
        %v731 = vsel %vm677, %v726, 0
        %733 = vmatpush.msra.mxu0 0.0
        %734 = vmatpush.msra.mxu0 0.0
        %735 = vmatpush.msra.mxu0 0.0
        %736 = vmatpush.msra.mxu0 0.0
        %737 = vmatpush.msra.mxu0 0.0
        %738 = vmatpush.msra.mxu0 0.0
        %739 = vmatpush.msra.mxu0 0.0
        %740 = vmatpush.msra.mxu0 0.0
        %741 = vmatpush.msra.mxu0 0.0
        %742 = vmatpush.msra.mxu0 0.0
        %743 = vmatpush.msra.mxu0 0.0
        %744 = vmatpush.msra.mxu0 0.0
        %745 = vmatpush.msra.mxu0 %v686
        %746 = vmatpush.msra.mxu0 %v659
        %747 = vmatpush.msra.mxu0 %v658
        %748 = vmatpush.msra.mxu0 %v657
        %749 = vmatmul.f32.gmra.mxu0 %v728
        %v750 = vpop.f32.mrf.mxu0
        %v751 = vadd.f32 0.0, %v750
        %752 = vmatmul.f32.gmra.mxu0 %v731
        %v753 = vpop.f32.mrf.mxu0
        %v754 = vadd.f32 0.0, %v753
        %755 = vdwg.mxu0
        %s756 = sld [smem:[#allocation6 + $0x2]]
        %v757 = vstv %s756
        %v758 = vadd.f32 %v641, %v757
        %v759 = vadd.f32 %v642, %v757
        %v760 = vmax.f32 %v758, 0.0
        %v761 = vmax.f32 %v759, 0.0
        %764 = vrot.lane.b32.xlu0 %v760, 127
        %v765 = vpop.permute.xlu0 %764
        %766 = vrot.lane.b32.xlu0 %v761, 127
        %v767 = vpop.permute.xlu0 %766
        %v770 = vmax.f32 %v760, %v765
        %v771 = vmax.f32 %v761, %v767
        %v773 = vsel %vm677, %v770, 0
        %v776 = vsel %vm677, %v771, 0
        %778 = vmatpush.msra.mxu0 0.0
        %779 = vmatpush.msra.mxu0 0.0
        %780 = vmatpush.msra.mxu0 0.0
        %781 = vmatpush.msra.mxu0 0.0
        %782 = vmatpush.msra.mxu0 0.0
        %783 = vmatpush.msra.mxu0 0.0
        %784 = vmatpush.msra.mxu0 0.0
        %785 = vmatpush.msra.mxu0 0.0
        %786 = vmatpush.msra.mxu0 0.0
        %787 = vmatpush.msra.mxu0 0.0
        %788 = vmatpush.msra.mxu0 0.0
        %789 = vmatpush.msra.mxu0 0.0
        %790 = vmatpush.msra.mxu0 %v686
        %791 = vmatpush.msra.mxu0 %v659
        %792 = vmatpush.msra.mxu0 %v658
        %793 = vmatpush.msra.mxu0 %v657
        %794 = vmatmul.f32.gmra.mxu0 %v773
        %v795 = vpop.f32.mrf.mxu0
        %v796 = vadd.f32 0.0, %v795
        %797 = vmatmul.f32.gmra.mxu0 %v776
        %v798 = vpop.f32.mrf.mxu0
        %v799 = vadd.f32 0.0, %v798
        %800 = vdwg.mxu0
        %s801 = sld [smem:[#allocation6 + $0x3]]
        %v802 = vstv %s801
        %v803 = vadd.f32 %v655, %v802
        %v804 = vadd.f32 %v656, %v802
        %v805 = vmax.f32 %v803, 0.0
        %v806 = vmax.f32 %v804, 0.0
        %809 = vrot.lane.b32.xlu0 %v805, 127
        %v810 = vpop.permute.xlu0 %809
        %811 = vrot.lane.b32.xlu0 %v806, 127
        %v812 = vpop.permute.xlu0 %811
        %v815 = vmax.f32 %v805, %v810
        %v816 = vmax.f32 %v806, %v812
        %v818 = vsel %vm677, %v815, 0
        %v821 = vsel %vm677, %v816, 0
        %823 = vmatpush.msra.mxu0 0.0
        %824 = vmatpush.msra.mxu0 0.0
        %825 = vmatpush.msra.mxu0 0.0
        %826 = vmatpush.msra.mxu0 0.0
        %827 = vmatpush.msra.mxu0 0.0
        %828 = vmatpush.msra.mxu0 0.0
        %829 = vmatpush.msra.mxu0 0.0
        %830 = vmatpush.msra.mxu0 0.0
        %831 = vmatpush.msra.mxu0 0.0
        %832 = vmatpush.msra.mxu0 0.0
        %833 = vmatpush.msra.mxu0 0.0
        %834 = vmatpush.msra.mxu0 0.0
        %835 = vmatpush.msra.mxu0 %v686
        %836 = vmatpush.msra.mxu0 %v659
        %837 = vmatpush.msra.mxu0 %v658
        %838 = vmatpush.msra.mxu0 %v657
        %839 = vmatmul.f32.gmra.mxu0 %v818
        %v840 = vpop.f32.mrf.mxu0
        %v841 = vadd.f32 0.0, %v840
        %842 = vmatmul.f32.gmra.mxu0 %v821
        %v843 = vpop.f32.mrf.mxu0
        %v844 = vadd.f32 0.0, %v843
        %845 = vdwg.mxu0
        %848 = vrot.lane.b32.xlu0 %v751, 16
        %v849 = vpop.permute.xlu0 %848
        %850 = vrot.lane.b32.xlu0 %v754, 16
        %v851 = vpop.permute.xlu0 %850
        %856 = vrot.lane.b32.xlu0 %v796, 32
        %v857 = vpop.permute.xlu0 %856
        %858 = vrot.lane.b32.xlu0 %v799, 32
        %v859 = vpop.permute.xlu0 %858
        %864 = vrot.lane.b32.xlu0 %v841, 48
        %v865 = vpop.permute.xlu0 %864
        %866 = vrot.lane.b32.xlu0 %v844, 48
        %v867 = vpop.permute.xlu0 %866
        %vm870 = vcmask 130048
        %v871 = vsel %vm870, %v706, %v849
        %v872 = vsel %vm870, %v709, %v851
        %vm873 = vcmask 261120
        %v874 = vsel %vm873, %v871, %v857
        %v875 = vsel %vm873, %v872, %v859
        %vm876 = vcmask 392192
        %v877 = vsel %vm876, %v874, %v865
        %v878 = vsel %vm876, %v875, %v867
        %v881 = vrot.slane %v877, 1
        %v882 = vrot.slane %v878, 1
        %v883 = vsel %vm684, %v881, %v882
        %v886 = vmax.f32 %v877, %v883
        %v887 = vmax.f32 %v878, %v882
        %vm888 = vcmask 523264
        %889 = vst.msk [vmem:[#allocation2] sm:$0xff] %vm888, %v886
        %vm890 = vcmask 522240
        %891 = vst.msk [vmem:[#allocation2 + $0x8] sm:$0x7f] %vm890, %v887
        %v892 = vld [vmem:[#allocation2] ss:$2 sm:$0xff]
        %893 = vst.msk [vmem:[%s231] sm:$0xff] %vm888, %v892
        %s894 = sand.u32 %s131, 1
        %s895 = scalar_lea.sflag [#allocation4], %s894
        %s896 = sand.u32 %s131, 1
        %s897 = smul.addr %s896, 8
        %s898 = scalar_lea.vmem [#allocation8], %s897
        // Predicated region
        $region45: #{tpu_custom_call.1} parent=35 // pred_check
          %p899 = pneg %p141
        $region46: #{tpu_custom_call.1} parent=35 // pred_check_branch
          %901 = sbr.rel (%p899) target = $region48
        $region47: #{tpu_custom_call.1} parent=35 // pred_region
          %903 = vsyncadd %s895, 0
          %s904 = smul.addr %s24, 2
          %s905 = sadd.s32 %s25, %s904
          %s906 = smul.addr %s905, 8
          %s907 = scalar_lea.hbm %s4, %s906
          %s909 = sshll.u32 %s898, 4
          %s910 = int_to_ptr.vmem [resolvable:$true] %s909
          %s911 = sshll.u32 %s907, 4
          %s912 = int_to_ptr.hbm [resolvable:$true] %s911
          %914 = dma.vmem_to_hbm [thread:$0]  %s910, 128, %s912, %s895
        $region48: #{tpu_custom_call.1} parent=35 // pred_fallthru
          _
      $region36: #{tpu_custom_call.1} parent=5 // pred_fallthru
        _
      %p915 = scmp.le.s32.totalorder 2, %s15
      // Predicated region
      $region49: #{tpu_custom_call.1} parent=5 // pred_check
        %p916 = pneg %p915
      $region50: #{tpu_custom_call.1} parent=5 // pred_check_branch
        %918 = sbr.rel (%p916) target = $region52
      $region51: #{tpu_custom_call.1} parent=5 // pred_region
        %s919 = ssub.s32 %s15, 2
        // Predicated region
        $region53: #{tpu_custom_call.1} parent=51 // pred_check
          %p920 = pneg %p147
        $region54: #{tpu_custom_call.1} parent=51 // pred_check_branch
          %922 = sbr.rel (%p920) target = $region56
        $region55: #{tpu_custom_call.1} parent=51 // pred_region
          %s923 = sand.u32 %s132, 1
          %s924 = scalar_lea.sflag [#allocation4], %s923
          %s925 = sand.u32 %s132, 1
          %s926 = smul.addr %s925, 8
          %s927 = scalar_lea.vmem [#allocation8], %s926
          %929 = dma.done %s924, 128
        $region56: #{tpu_custom_call.1} parent=51 // pred_fallthru
          _
      $region52: #{tpu_custom_call.1} parent=5 // pred_fallthru
        _
    $region6: #{tpu_custom_call.1} parent=1 // loop_footer
      %s19 = sadd.s32 1, %s15
    $region7: #{tpu_custom_call.1} parent=1 // loop_footer_branch
      %14 = sbr.rel target = $region3
    $region8: #{tpu_custom_call.1} parent=1 // loop_exit
      _
    %930 = vsyncpa [#allocation4], 1
    %s931 = scalar_lea.sflag [#allocation4], 1
    %932 = vsyncpa %s931, 1
    %933 = vsyncpa [#allocation5], 1
    %s934 = scalar_lea.sflag [#allocation5], 1
    %935 = vsyncpa %s934, 1
    %936 = vsyncpa [#allocation7], 1

</llo_original>
